<compile_context>
chip_gen: v7x
topology: tpu7x:2x2x1
jax: 0.10.0
libtpu: 0.0.40
codegen_flags: <defaults>
</compile_context>

<pallas_src>
import functools

import jax
import jax.numpy as jnp
from jax.experimental import pallas as pl
from jax.experimental.pallas import tpu as pltpu


def mlp_kernel(x_ref, w1_ref, b1_ref, w2_ref, b2_ref, w3_ref, b3_ref,
               w4_ref, b4_ref, o_ref):
    # Layer 1: (tm, D) @ (D, 256) on the MXU; bf16 operands, f32 accumulation.
    # (K=32 underfills the MXU depth; that is amortized by the large batch tile.)
    x = x_ref[...].astype(jnp.bfloat16)
    h = jnp.dot(x, w1_ref[...], preferred_element_type=jnp.float32) + b1_ref[...]
    h = jnp.maximum(h, 0.0)          # ReLU   (Dropout(0.3) -> identity in eval)

    # Layer 2: (tm, 256) @ (256, 128)
    h = jnp.dot(h.astype(jnp.bfloat16), w2_ref[...],
                preferred_element_type=jnp.float32) + b2_ref[...]
    h = jnp.maximum(h, 0.0)          # ReLU   (Dropout(0.2) -> identity in eval)

    # Layer 3: (tm, 128) @ (128, 64)
    h = jnp.dot(h.astype(jnp.bfloat16), w3_ref[...],
                preferred_element_type=jnp.float32) + b3_ref[...]
    h = jnp.maximum(h, 0.0)          # ReLU

    # Layer 4 (64 -> 1): N=1 MXU matmul wastes a pass, so use VPU multiply +
    # XLU lane-reduction.  w4_ref is the (1, 64) f32 weight row, b4 is an SMEM scalar.
    z = jnp.sum(h * w4_ref[...], axis=-1, keepdims=True) + b4_ref[0]   # (tm, 1) f32

    # Lane-dense store: one XLU transpose, then a full-width (1, tm) row write.
    o_ref[...] = jnp.transpose(jax.nn.sigmoid(z))                      # (1, tm)


def _round_up(x, m):
    return ((x + m - 1) // m) * m


def _detect_tensorcores_per_chip():
    """Best-effort TC-per-chip detection (v7x has 2, v5e/v6e have 1)."""
    try:
        info = pltpu.get_tpu_info()
        for name in ("num_cores", "tensorcores_per_chip", "num_tensorcores",
                     "cores_per_chip", "num_cores_per_chip"):
            v = getattr(info, name, None)
            if isinstance(v, int) and v > 0:
                return v
    except Exception:
        pass
    return 1


@functools.partial(jax.jit, static_argnames=("tile_m", "num_cores"))
def mlp_forward(x, params, tile_m=1024, num_cores=1):
    """x: (B, input_size) float32 (or bf16); params: dict w1..b4 (f32, PyTorch layout
    transposed to (in, out)).  Returns (B, 1) float32 = sigmoid(MLP(x))."""
    B, D = x.shape

    # --- batch tile selection -------------------------------------------------
    # One large tile per grid step (grid is a serial loop on a single TensorCore,
    # so small tiles only add per-step overhead).  Only split the batch when there
    # are multiple TensorCores AND each core still gets a >=512-row tile.
    tm = min(tile_m, _round_up(B, 8))
    if num_cores > 1 and B >= 2 * 512 and pl.cdiv(B, tm) < num_cores:
        tm = max(512, _round_up(pl.cdiv(B, num_cores), 8))
    num_tiles = pl.cdiv(B, tm)
    grid = (num_tiles,)

    # --- parameters -----------------------------------------------------------
    # Matmul weights in bf16 (halves weight DMA, bf16 MXU path); biases and the
    # final (1, 64) row stay f32 for the VPU/EUP epilogue; b4 goes to SMEM.
    w1 = params["w1"].astype(jnp.bfloat16)
    w2 = params["w2"].astype(jnp.bfloat16)
    w3 = params["w3"].astype(jnp.bfloat16)
    w4_row = params["w4"].reshape(1, -1).astype(jnp.float32)   # (1, 64)
    b1, b2, b3 = params["b1"], params["b2"], params["b3"]
    b4 = params["b4"].reshape(-1).astype(jnp.float32)          # (1,) SMEM scalar

    # Weights/biases are grid-invariant: full blocks with constant index maps
    # (resident in VMEM; total < 0.2 MB, so VMEM is never the constraint here).
    def full_spec(arr):
        return pl.BlockSpec(arr.shape, lambda i: (0,) * arr.ndim)

    compiler_kwargs = {"dimension_semantics": ("parallel",)}
    if tm >= 4096:
        # Explicit headroom for f32 intermediates + double-buffered x/out,
        # especially on v7x (scoped default 32 MiB of 64 MiB physical VMEM).
        compiler_kwargs["vmem_limit_bytes"] = 48 * 1024 * 1024

    out = pl.pallas_call(
        mlp_kernel,
        # Lane-dense output: one (1, tm) row per grid step.
        out_shape=jax.ShapeDtypeStruct((num_tiles, tm), jnp.float32),
        grid_spec=pltpu.PrefetchScalarGridSpec(
            num_scalar_prefetch=0,
            grid=grid,
            in_specs=[
                pl.BlockSpec((tm, D), lambda i: (i, 0)),   # x tile over batch
                full_spec(w1), full_spec(b1),
                full_spec(w2), full_spec(b2),
                full_spec(w3), full_spec(b3),
                full_spec(w4_row),
                pl.BlockSpec(memory_space=pltpu.MemorySpace.SMEM),   # b4 scalar
            ],
            out_specs=pl.BlockSpec((1, tm), lambda i: (i, 0)),
        ),
        compiler_params=pltpu.CompilerParams(**compiler_kwargs),
    )(x, w1, b1, w2, b2, w3, b3, w4_row, b4)

    # Back to (B, 1); rows from the ragged/padded tail are discarded here.
    return out.reshape(num_tiles * tm, 1)[:B]


def init_params(key, input_size):
    """Deterministic init mimicking PyTorch nn.Linear default (uniform +/- 1/sqrt(fan_in)).
    Weights stored as (in_features, out_features) so the kernel computes x @ W + b."""
    dims = [(input_size, 256), (256, 128), (128, 64), (64, 1)]
    params = {}
    keys = jax.random.split(key, 2 * len(dims))
    for idx, (fan_in, fan_out) in enumerate(dims):
        bound = 1.0 / jnp.sqrt(fan_in)
        w = jax.random.uniform(keys[2 * idx], (fan_in, fan_out),
                               minval=-bound, maxval=bound, dtype=jnp.float32)
        b = jax.random.uniform(keys[2 * idx + 1], (1, fan_out),
                               minval=-bound, maxval=bound, dtype=jnp.float32)
        params[f"w{idx + 1}"] = w
        params[f"b{idx + 1}"] = b
    return params


def ref_forward(x, params):
    """Pure-JAX reference mirroring the kernel's numerics (bf16 matmul operands,
    f32 accumulation, f32 epilogue; dropout = identity in eval mode)."""
    h = jnp.dot(x.astype(jnp.bfloat16), params["w1"].astype(jnp.bfloat16),
                preferred_element_type=jnp.float32) + params["b1"]
    h = jnp.maximum(h, 0.0)
    h = jnp.dot(h.astype(jnp.bfloat16), params["w2"].astype(jnp.bfloat16),
                preferred_element_type=jnp.float32) + params["b2"]
    h = jnp.maximum(h, 0.0)
    h = jnp.dot(h.astype(jnp.bfloat16), params["w3"].astype(jnp.bfloat16),
                preferred_element_type=jnp.float32) + params["b3"]
    h = jnp.maximum(h, 0.0)
    z = jnp.sum(h * params["w4"].reshape(1, -1), axis=-1, keepdims=True) \
        + params["b4"].reshape(1, 1)
    return jax.nn.sigmoid(z)


if __name__ == "__main__":
    key = jax.random.PRNGKey(0)
    k_x, k_p, k_x2 = jax.random.split(key, 3)

    input_size = 32
    params = init_params(k_p, input_size)
    num_cores = _detect_tensorcores_per_chip()

    # Small demo batch (single grid step).
    batch = 8
    x = jax.random.normal(k_x, (batch, input_size), dtype=jnp.float32)
    out = jax.block_until_ready(mlp_forward(x, params, num_cores=num_cores))
    ref = ref_forward(x, params)
    assert out.shape == (batch, 1), out.shape
    assert jnp.allclose(out, ref, atol=1e-2, rtol=1e-2), "mismatch vs reference (small batch)"

    # Larger batch: exercises the lane-dense output path with a ragged tail.
    batch2 = 300
    x2 = jax.random.normal(k_x2, (batch2, input_size), dtype=jnp.float32)
    out2 = jax.block_until_ready(mlp_forward(x2, params, num_cores=num_cores))
    ref2 = ref_forward(x2, params)
    assert out2.shape == (batch2, 1), out2.shape
    assert jnp.allclose(out2, ref2, atol=1e-2, rtol=1e-2), "mismatch vs reference (large batch)"

    print("KERNEL_OK")
</pallas_src>

<mosaic_0001>
module attributes {stable_mosaic.version = 11 : i64} {
  func.func @mlp_kernel(%arg0: i32, %arg1: memref<8x32xf32, #tpu.memory_space<vmem>>, %arg2: memref<32x256xbf16, #tpu.memory_space<vmem>>, %arg3: memref<1x256xf32, #tpu.memory_space<vmem>>, %arg4: memref<256x128xbf16, #tpu.memory_space<vmem>>, %arg5: memref<1x128xf32, #tpu.memory_space<vmem>>, %arg6: memref<128x64xbf16, #tpu.memory_space<vmem>>, %arg7: memref<1x64xf32, #tpu.memory_space<vmem>>, %arg8: memref<1x64xf32, #tpu.memory_space<vmem>>, %arg9: memref<1xf32, #tpu.memory_space<smem>>, %arg10: memref<1x8xf32, #tpu.memory_space<vmem>>) attributes {dimension_semantics = [#tpu.dimension_semantics<parallel>], iteration_bounds = array<i64: 1>, scalar_prefetch = 0 : i64, scratch_operands = 0 : i64, tpu.core_type = #tpu.core_type<tc>, window_params = [{transform_indices = @transform_0, window_bounds = array<i64: 8, 32>}, {pipeline_mode = #tpu.pipeline_mode<synchronous>, transform_indices = @transform_1, window_bounds = array<i64: 32, 256>}, {pipeline_mode = #tpu.pipeline_mode<synchronous>, transform_indices = @transform_2, window_bounds = array<i64: 1, 256>}, {pipeline_mode = #tpu.pipeline_mode<synchronous>, transform_indices = @transform_3, window_bounds = array<i64: 256, 128>}, {pipeline_mode = #tpu.pipeline_mode<synchronous>, transform_indices = @transform_4, window_bounds = array<i64: 1, 128>}, {pipeline_mode = #tpu.pipeline_mode<synchronous>, transform_indices = @transform_5, window_bounds = array<i64: 128, 64>}, {pipeline_mode = #tpu.pipeline_mode<synchronous>, transform_indices = @transform_6, window_bounds = array<i64: 1, 64>}, {pipeline_mode = #tpu.pipeline_mode<synchronous>, transform_indices = @transform_7, window_bounds = array<i64: 1, 64>}, {transform_indices = @transform_8, window_bounds = array<i64: 1>}, {transform_indices = @transform_9, window_bounds = array<i64: 1, 8>}]} {
    %c0 = arith.constant 0 : index
    %c0_0 = arith.constant 0 : index
    %0 = vector.load %arg1[%c0, %c0_0] : memref<8x32xf32, #tpu.memory_space<vmem>>, vector<8x32xf32>
    %1 = arith.truncf %0 : vector<8x32xf32> to vector<8x32xbf16>
    %c0_1 = arith.constant 0 : index
    %c0_2 = arith.constant 0 : index
    %2 = vector.load %arg2[%c0_1, %c0_2] : memref<32x256xbf16, #tpu.memory_space<vmem>>, vector<32x256xbf16>
    %cst = arith.constant dense<0.000000e+00> : vector<8x256xf32>
    %3 = tpu.matmul %1, %2, %cst {dimension_numbers = #tpu.dot_dimension_numbers<[1], [0], [0], [1], [0, 0, 1, 1], [], []>} : vector<8x32xbf16>, vector<32x256xbf16>, vector<8x256xf32> -> vector<8x256xf32>
    %c0_3 = arith.constant 0 : index
    %c0_4 = arith.constant 0 : index
    %4 = vector.load %arg3[%c0_3, %c0_4] : memref<1x256xf32, #tpu.memory_space<vmem>>, vector<1x256xf32>
    %5 = vector.broadcast %4 : vector<1x256xf32> to vector<8x256xf32>
    %6 = arith.addf %3, %5 : vector<8x256xf32>
    %cst_5 = arith.constant 0.000000e+00 : f32
    %7 = vector.broadcast %cst_5 : f32 to vector<8x256xf32>
    %8 = arith.maximumf %6, %7 : vector<8x256xf32>
    %9 = arith.truncf %8 : vector<8x256xf32> to vector<8x256xbf16>
    %c0_6 = arith.constant 0 : index
    %c0_7 = arith.constant 0 : index
    %10 = vector.load %arg4[%c0_6, %c0_7] : memref<256x128xbf16, #tpu.memory_space<vmem>>, vector<256x128xbf16>
    %cst_8 = arith.constant dense<0.000000e+00> : vector<8x128xf32>
    %11 = tpu.matmul %9, %10, %cst_8 {dimension_numbers = #tpu.dot_dimension_numbers<[1], [0], [0], [1], [0, 0, 1, 1], [], []>} : vector<8x256xbf16>, vector<256x128xbf16>, vector<8x128xf32> -> vector<8x128xf32>
    %c0_9 = arith.constant 0 : index
    %c0_10 = arith.constant 0 : index
    %12 = vector.load %arg5[%c0_9, %c0_10] : memref<1x128xf32, #tpu.memory_space<vmem>>, vector<1x128xf32>
    %13 = vector.broadcast %12 : vector<1x128xf32> to vector<8x128xf32>
    %14 = arith.addf %11, %13 : vector<8x128xf32>
    %cst_11 = arith.constant 0.000000e+00 : f32
    %15 = vector.broadcast %cst_11 : f32 to vector<8x128xf32>
    %16 = arith.maximumf %14, %15 : vector<8x128xf32>
    %17 = arith.truncf %16 : vector<8x128xf32> to vector<8x128xbf16>
    %c0_12 = arith.constant 0 : index
    %c0_13 = arith.constant 0 : index
    %18 = vector.load %arg6[%c0_12, %c0_13] : memref<128x64xbf16, #tpu.memory_space<vmem>>, vector<128x64xbf16>
    %cst_14 = arith.constant dense<0.000000e+00> : vector<8x64xf32>
    %19 = tpu.matmul %17, %18, %cst_14 {dimension_numbers = #tpu.dot_dimension_numbers<[1], [0], [0], [1], [0, 0, 1, 1], [], []>} : vector<8x128xbf16>, vector<128x64xbf16>, vector<8x64xf32> -> vector<8x64xf32>
    %c0_15 = arith.constant 0 : index
    %c0_16 = arith.constant 0 : index
    %20 = vector.load %arg7[%c0_15, %c0_16] : memref<1x64xf32, #tpu.memory_space<vmem>>, vector<1x64xf32>
    %21 = vector.broadcast %20 : vector<1x64xf32> to vector<8x64xf32>
    %22 = arith.addf %19, %21 : vector<8x64xf32>
    %cst_17 = arith.constant 0.000000e+00 : f32
    %23 = vector.broadcast %cst_17 : f32 to vector<8x64xf32>
    %24 = arith.maximumf %22, %23 : vector<8x64xf32>
    %c0_18 = arith.constant 0 : index
    %c0_19 = arith.constant 0 : index
    %25 = vector.load %arg8[%c0_18, %c0_19] : memref<1x64xf32, #tpu.memory_space<vmem>>, vector<1x64xf32>
    %26 = vector.broadcast %25 : vector<1x64xf32> to vector<8x64xf32>
    %27 = arith.mulf %24, %26 : vector<8x64xf32>
    %cst_20 = arith.constant dense<0.000000e+00> : vector<8xf32>
    %28 = vector.multi_reduction <add>, %27, %cst_20 [1] : vector<8x64xf32> to vector<8xf32>
    %29 = vector.shape_cast %28 : vector<8xf32> to vector<8x1xf32>
    %c0_21 = arith.constant 0 : index
    %30 = memref.load %arg9[%c0_21] : memref<1xf32, #tpu.memory_space<smem>>
    %31 = vector.broadcast %30 : f32 to vector<8x1xf32>
    %32 = arith.addf %29, %31 : vector<8x1xf32>
    %33 = arith.negf %32 : vector<8x1xf32>
    %34 = math.exp %33 : vector<8x1xf32>
    %cst_22 = arith.constant 1.000000e+00 : f32
    %35 = vector.broadcast %cst_22 : f32 to vector<8x1xf32>
    %36 = arith.addf %35, %34 : vector<8x1xf32>
    %37 = arith.divf %35, %36 : vector<8x1xf32>
    %38 = tpu.transpose %37, [1, 0] : vector<8x1xf32> -> vector<1x8xf32>
    %c0_23 = arith.constant 0 : index
    %c0_24 = arith.constant 0 : index
    %39 = vector.load %arg10[%c0_23, %c0_24] : memref<1x8xf32, #tpu.memory_space<vmem>>, vector<1x8xf32>
    tpu.vector_store %arg10[%c0_23, %c0_24], %38 {strides = array<i32>} : memref<1x8xf32, #tpu.memory_space<vmem>>, vector<1x8xf32>,
    return
  }
  func.func @transform_0(%arg0: i32) -> (i32, i32) {
    %c0_i32 = arith.constant 0 : i32
    %c0_i32_0 = arith.constant 0 : i32
    return %arg0, %c0_i32 : i32, i32
  }
  func.func @transform_1(%arg0: i32) -> (i32, i32) {
    %c0_i32 = arith.constant 0 : i32
    %c0_i32_0 = arith.constant 0 : i32
    %c0_i32_1 = arith.constant 0 : i32
    return %c0_i32, %c0_i32_0 : i32, i32
  }
  func.func @transform_2(%arg0: i32) -> (i32, i32) {
    %c0_i32 = arith.constant 0 : i32
    %c0_i32_0 = arith.constant 0 : i32
    %c0_i32_1 = arith.constant 0 : i32
    return %c0_i32, %c0_i32_0 : i32, i32
  }
  func.func @transform_3(%arg0: i32) -> (i32, i32) {
    %c0_i32 = arith.constant 0 : i32
    %c0_i32_0 = arith.constant 0 : i32
    %c0_i32_1 = arith.constant 0 : i32
    return %c0_i32, %c0_i32_0 : i32, i32
  }
  func.func @transform_4(%arg0: i32) -> (i32, i32) {
    %c0_i32 = arith.constant 0 : i32
    %c0_i32_0 = arith.constant 0 : i32
    %c0_i32_1 = arith.constant 0 : i32
    return %c0_i32, %c0_i32_0 : i32, i32
  }
  func.func @transform_5(%arg0: i32) -> (i32, i32) {
    %c0_i32 = arith.constant 0 : i32
    %c0_i32_0 = arith.constant 0 : i32
    %c0_i32_1 = arith.constant 0 : i32
    return %c0_i32, %c0_i32_0 : i32, i32
  }
  func.func @transform_6(%arg0: i32) -> (i32, i32) {
    %c0_i32 = arith.constant 0 : i32
    %c0_i32_0 = arith.constant 0 : i32
    %c0_i32_1 = arith.constant 0 : i32
    return %c0_i32, %c0_i32_0 : i32, i32
  }
  func.func @transform_7(%arg0: i32) -> (i32, i32) {
    %c0_i32 = arith.constant 0 : i32
    %c0_i32_0 = arith.constant 0 : i32
    %c0_i32_1 = arith.constant 0 : i32
    return %c0_i32, %c0_i32_0 : i32, i32
  }
  func.func @transform_8(%arg0: i32) -> i32 {
    %c0_i32 = arith.constant 0 : i32
    %c0_i32_0 = arith.constant 0 : i32
    return %c0_i32 : i32
  }
  func.func @transform_9(%arg0: i32) -> (i32, i32) {
    %c0_i32 = arith.constant 0 : i32
    %c0_i32_0 = arith.constant 0 : i32
    return %arg0, %c0_i32 : i32, i32
  }
}

</mosaic_0001>

<llo_original>
// kernel: mlp_forward.1
$region0: #{mlp_forward.1}
  #allocation0 [shape = 'u32[]', space=smem, size = 0x4, offset = 0x4, fixed_abs, tag = 'smem constant byte address 0x4 - core index']
  #allocation1 [shape = 'u32[144,128]{1,0:T(1,128)}', space=vmem, size = 0x12000, scoped, tag = 'internal scratch']
  #allocation2 [shape = 'f32[1]{0:T(128)S(6)}', space=smem, size = 0x200, scoped, tag = 'scoped memory for mlp_forward.1']
  %s0 = inlined_call_operand.vmem [shape: f32[8,32], index: 0, kind: input, shape index: {}]
  %s1 = inlined_call_operand.vmem [shape: bf16[32,256], index: 1, kind: input, shape index: {}]
  %s2 = inlined_call_operand.vmem [shape: f32[1,256], index: 2, kind: input, shape index: {}]
  %s3 = inlined_call_operand.vmem [shape: bf16[256,128], index: 3, kind: input, shape index: {}]
  %s4 = inlined_call_operand.vmem [shape: f32[1,128], index: 4, kind: input, shape index: {}]
  %s5 = inlined_call_operand.vmem [shape: bf16[128,64], index: 5, kind: input, shape index: {}]
  %s6 = inlined_call_operand.vmem [shape: f32[1,64], index: 6, kind: input, shape index: {}]
  %s7 = inlined_call_operand.vmem [shape: f32[1,64], index: 7, kind: input, shape index: {}]
  %s8 = inlined_call_operand.<no memory space> [shape: f32[1], index: 8, kind: input, shape index: {}]
  %s9 = inlined_call_operand.hbm [shape: f32[1,8], index: 9, kind: output, shape index: {}]
  %s10 = sld [smem:[#allocation0]]
  $region46: #{mlp_forward.1} parent=0
    _
  %s12 = ssub.s32 1, %s10
  %s13 = scalar_select 0, %s12, %s10
  %14 = sst [smem:[#allocation2]] %s8
  $region1: #{mlp_forward.1} parent=0
    #allocation3 [shape = 'u8[512]{0}', space=vmem, size = 0x400, scoped, tag = 'output window, operand 0, single buffered']
    #allocation4 [shape = 's32[1]{0}', space=sflag, size = 0x4, scoped, tag = 'scoped memory for mlp_forward.1']
    %15 = vsyncpa [#allocation4], 0
    // Predicated region
    $region2: #{mlp_forward.1} parent=1 // pred_check
      _
    $region3: #{mlp_forward.1} parent=1 // pred_check_branch
      %17 = sbr.rel (0) target = $region5
    $region4: #{mlp_forward.1} parent=1 // pred_region
      _
    $region5: #{mlp_forward.1} parent=1 // pred_fallthru
      _
    // Predicated region
    $region6: #{mlp_forward.1} parent=1 // pred_check
      _
    $region7: #{mlp_forward.1} parent=1 // pred_check_branch
      %19 = sbr.rel (0) target = $region9
    $region8: #{mlp_forward.1} parent=1 // pred_region
      _
    $region9: #{mlp_forward.1} parent=1 // pred_fallthru
      _
    // Predicated region
    $region10: #{mlp_forward.1} parent=1 // pred_check
      _
    $region11: #{mlp_forward.1} parent=1 // pred_check_branch
      %21 = sbr.rel (0) target = $region13
    $region12: #{mlp_forward.1} parent=1 // pred_region
      _
    $region13: #{mlp_forward.1} parent=1 // pred_fallthru
      _
    // Predicated region
    $region14: #{mlp_forward.1} parent=1 // pred_check
      _
    $region15: #{mlp_forward.1} parent=1 // pred_check_branch
      %23 = sbr.rel (0) target = $region17
    $region16: #{mlp_forward.1} parent=1 // pred_region
      _
    $region17: #{mlp_forward.1} parent=1 // pred_fallthru
      _
    // Predicated region
    $region18: #{mlp_forward.1} parent=1 // pred_check
      _
    $region19: #{mlp_forward.1} parent=1 // pred_check_branch
      %25 = sbr.rel (0) target = $region21
    $region20: #{mlp_forward.1} parent=1 // pred_region
      _
    $region21: #{mlp_forward.1} parent=1 // pred_fallthru
      _
    // Predicated region
    $region22: #{mlp_forward.1} parent=1 // pred_check
      _
    $region23: #{mlp_forward.1} parent=1 // pred_check_branch
      %27 = sbr.rel (0) target = $region25
    $region24: #{mlp_forward.1} parent=1 // pred_region
      _
    $region25: #{mlp_forward.1} parent=1 // pred_fallthru
      _
    // Predicated region
    $region26: #{mlp_forward.1} parent=1 // pred_check
      _
    $region27: #{mlp_forward.1} parent=1 // pred_check_branch
      %29 = sbr.rel (0) target = $region29
    $region28: #{mlp_forward.1} parent=1 // pred_region
      _
    $region29: #{mlp_forward.1} parent=1 // pred_fallthru
      _
    // Predicated region
    $region30: #{mlp_forward.1} parent=1 // pred_check
      _
    $region31: #{mlp_forward.1} parent=1 // pred_check_branch
      %31 = sbr.rel (0) target = $region33
    $region32: #{mlp_forward.1} parent=1 // pred_region
      _
    $region33: #{mlp_forward.1} parent=1 // pred_fallthru
      _
    // Predicated region
    $region34: #{mlp_forward.1} parent=1 // pred_check
      _
    $region35: #{mlp_forward.1} parent=1 // pred_check_branch
      %33 = sbr.rel (0) target = $region37
    $region36: #{mlp_forward.1} parent=1 // pred_region
      _
    $region37: #{mlp_forward.1} parent=1 // pred_fallthru
      _
    %v35 = vld [vmem:[%s0] sm:$0xff]
    %v36 = vpack.c.bf16 %v35, %v35
    %v37 = vld [vmem:[%s1] sm:$0xff]
    %v38 = vld [vmem:[%s1 + $0x8] sm:$0xff]
    %v39 = vld [vmem:[%s1 + $0x10] sm:$0xff]
    %v40 = vld [vmem:[%s1 + $0x18] sm:$0xff]
    %v41 = vld [vmem:[%s2] sm:$0x3]
    %v43 = vlaneseq
    %v44 = vshrl.u32 %v43, 7
    %v45 = vsub.s32 0, %v44
    %v46 = vrot.slane %v41, %v45
    %v47 = vlaneseq
    %v48 = vshrl.u32 %v47, 7
    %v49 = vsub.s32 1, %v48
    %v50 = vrot.slane %v41, %v49
    %v57 = vunpack.c.l.b16 %v37
    %v58 = vunpack.c.h.b16 %v37
    %v59 = vunpack.c.l.b16 %v38
    %v60 = vunpack.c.h.b16 %v38
    %v61 = vunpack.c.l.b16 %v39
    %v62 = vunpack.c.h.b16 %v39
    %v63 = vunpack.c.l.b16 %v40
    %v64 = vunpack.c.h.b16 %v40
    %v65 = vpack.c.b16 %v59, %v57
    %v66 = vpack.c.b16 %v60, %v58
    %v67 = vpack.c.b16 %v63, %v61
    %v68 = vpack.c.b16 %v64, %v62
    %vm73 = vcmask 261120
    %v75 = vsel %vm73, %v36, 0
    %77 = vmatprep.subr.bf16.mxu0 %v66
    %78 = vmatpush1.bf16.msra.mxu0 %v65
    %79 = vmatprep.subr.bf16.mxu0 %v68
    %80 = vmatpush1.bf16.msra.mxu0 %v67
    %81 = vmatprep.subr.bf16.mxu0 0
    %82 = vmatpush1.bf16.msra.mxu0 0
    %83 = vmatprep.subr.bf16.mxu0 0
    %84 = vmatpush1.bf16.msra.mxu0 0
    %85 = vmatprep.subr.bf16.mxu0 0
    %86 = vmatpush1.bf16.msra.mxu0 0
    %87 = vmatprep.subr.bf16.mxu0 0
    %88 = vmatpush1.bf16.msra.mxu0 0
    %89 = vmatprep.subr.bf16.mxu0 0
    %90 = vmatpush1.bf16.msra.mxu0 0
    %91 = vmatprep.subr.bf16.mxu0 0
    %92 = vmatpush1.bf16.msra.mxu0 0
    %93 = vmatprep.subr.bf16.mxu0 0
    %94 = vmatpush1.bf16.msra.mxu0 0
    %95 = vmatprep.subr.bf16.mxu0 0
    %96 = vmatpush1.bf16.msra.mxu0 0
    %97 = vmatprep.subr.bf16.mxu0 0
    %98 = vmatpush1.bf16.msra.mxu0 0
    %99 = vmatprep.subr.bf16.mxu0 0
    %100 = vmatpush1.bf16.msra.mxu0 0
    %101 = vmatprep.subr.bf16.mxu0 0
    %102 = vmatpush1.bf16.msra.mxu0 0
    %103 = vmatprep.subr.bf16.mxu0 0
    %104 = vmatpush1.bf16.msra.mxu0 0
    %105 = vmatprep.subr.bf16.mxu0 0
    %106 = vmatpush1.bf16.msra.mxu0 0
    %107 = vmatprep.subr.bf16.mxu0 0
    %108 = vmatpush1.bf16.msra.mxu0 0
    %109 = vmatprep.mubr.bf16.mxu0 0
    %110 = vmatmul.mubr.bf16.gmra.mrb[0].mxu0 %v75
    %v111 = vpop.f32.mrb[0].mxu0
    %v112 = vadd.f32 %v46, %v111
    %v113 = vpop.f32.mrb[0].mxu0
    %v114 = vadd.f32 %v50, %v113
    %v115 = vpop.f32.mrb[0].mxu0
    %v116 = vpop.f32.mrb[0].mxu0
    %117 = vdwg.mxu0
    %v118 = vmax.f32 %v112, 0.0
    %v119 = vmax.f32 %v114, 0.0
    %v120 = vpack.c.bf16 %v118, %v118
    %v121 = vpack.c.bf16 %v119, %v119
    %v122 = vld [vmem:[%s3] sm:$0xf]
    %v123 = vld [vmem:[%s3 + $0x4] sm:$0xf]
    %v124 = vld [vmem:[%s3 + $0x8] sm:$0xf]
    %v125 = vld [vmem:[%s3 + $0xc] sm:$0xf]
    %v126 = vld [vmem:[%s3 + $0x10] sm:$0xf]
    %v127 = vld [vmem:[%s3 + $0x14] sm:$0xf]
    %v128 = vld [vmem:[%s3 + $0x18] sm:$0xf]
    %v129 = vld [vmem:[%s3 + $0x1c] sm:$0xf]
    %v130 = vld [vmem:[%s3 + $0x20] sm:$0xf]
    %v131 = vld [vmem:[%s3 + $0x24] sm:$0xf]
    %v132 = vld [vmem:[%s3 + $0x28] sm:$0xf]
    %v133 = vld [vmem:[%s3 + $0x2c] sm:$0xf]
    %v134 = vld [vmem:[%s3 + $0x30] sm:$0xf]
    %v135 = vld [vmem:[%s3 + $0x34] sm:$0xf]
    %v136 = vld [vmem:[%s3 + $0x38] sm:$0xf]
    %v137 = vld [vmem:[%s3 + $0x3c] sm:$0xf]
    %v138 = vld [vmem:[%s3 + $0x40] sm:$0xf]
    %v139 = vld [vmem:[%s3 + $0x44] sm:$0xf]
    %v140 = vld [vmem:[%s3 + $0x48] sm:$0xf]
    %v141 = vld [vmem:[%s3 + $0x4c] sm:$0xf]
    %v142 = vld [vmem:[%s3 + $0x50] sm:$0xf]
    %v143 = vld [vmem:[%s3 + $0x54] sm:$0xf]
    %v144 = vld [vmem:[%s3 + $0x58] sm:$0xf]
    %v145 = vld [vmem:[%s3 + $0x5c] sm:$0xf]
    %v146 = vld [vmem:[%s3 + $0x60] sm:$0xf]
    %v147 = vld [vmem:[%s3 + $0x64] sm:$0xf]
    %v148 = vld [vmem:[%s3 + $0x68] sm:$0xf]
    %v149 = vld [vmem:[%s3 + $0x6c] sm:$0xf]
    %v150 = vld [vmem:[%s3 + $0x70] sm:$0xf]
    %v151 = vld [vmem:[%s3 + $0x74] sm:$0xf]
    %v152 = vld [vmem:[%s3 + $0x78] sm:$0xf]
    %v153 = vld [vmem:[%s3 + $0x7c] sm:$0xf]
    %v154 = vld [vmem:[%s4] sm:$0x1]
    %v156 = vlaneseq
    %v157 = vshrl.u32 %v156, 7
    %v158 = vsub.s32 0, %v157
    %v159 = vrot.slane %v154, %v158
    %v193 = vunpack.c.l.b16 %v122
    %v194 = vunpack.c.l.b16 %v123
    %v195 = vunpack.c.l.b16 %v124
    %v196 = vunpack.c.l.b16 %v125
    %v197 = vunpack.c.l.b16 %v126
    %v198 = vunpack.c.l.b16 %v127
    %v199 = vunpack.c.l.b16 %v128
    %v200 = vunpack.c.l.b16 %v129
    %v201 = vunpack.c.l.b16 %v130
    %v202 = vunpack.c.l.b16 %v131
    %v203 = vunpack.c.l.b16 %v132
    %v204 = vunpack.c.l.b16 %v133
    %v205 = vunpack.c.l.b16 %v134
    %v206 = vunpack.c.l.b16 %v135
    %v207 = vunpack.c.l.b16 %v136
    %v208 = vunpack.c.l.b16 %v137
    %v209 = vunpack.c.l.b16 %v138
    %v210 = vunpack.c.l.b16 %v139
    %v211 = vunpack.c.l.b16 %v140
    %v212 = vunpack.c.l.b16 %v141
    %v213 = vunpack.c.l.b16 %v142
    %v214 = vunpack.c.l.b16 %v143
    %v215 = vunpack.c.l.b16 %v144
    %v216 = vunpack.c.l.b16 %v145
    %v217 = vunpack.c.l.b16 %v146
    %v218 = vunpack.c.l.b16 %v147
    %v219 = vunpack.c.l.b16 %v148
    %v220 = vunpack.c.l.b16 %v149
    %v221 = vunpack.c.l.b16 %v150
    %v222 = vunpack.c.l.b16 %v151
    %v223 = vunpack.c.l.b16 %v152
    %v224 = vunpack.c.l.b16 %v153
    %v225 = vpack.c.b16 %v194, %v193
    %v226 = vpack.c.b16 %v196, %v195
    %v227 = vpack.c.b16 %v198, %v197
    %v228 = vpack.c.b16 %v200, %v199
    %v229 = vpack.c.b16 %v202, %v201
    %v230 = vpack.c.b16 %v204, %v203
    %v231 = vpack.c.b16 %v206, %v205
    %v232 = vpack.c.b16 %v208, %v207
    %v233 = vpack.c.b16 %v210, %v209
    %v234 = vpack.c.b16 %v212, %v211
    %v235 = vpack.c.b16 %v214, %v213
    %v236 = vpack.c.b16 %v216, %v215
    %v237 = vpack.c.b16 %v218, %v217
    %v238 = vpack.c.b16 %v220, %v219
    %v239 = vpack.c.b16 %v222, %v221
    %v240 = vpack.c.b16 %v224, %v223
    %257 = vmatprep.subr.bf16.mxu0 0
    %258 = vmatpush1.bf16.msra.mxu0 %v225
    %259 = vmatprep.subr.bf16.mxu0 0
    %260 = vmatpush1.bf16.msra.mxu0 %v226
    %261 = vmatprep.subr.bf16.mxu0 0
    %262 = vmatpush1.bf16.msra.mxu0 %v227
    %263 = vmatprep.subr.bf16.mxu0 0
    %264 = vmatpush1.bf16.msra.mxu0 %v228
    %265 = vmatprep.subr.bf16.mxu0 0
    %266 = vmatpush1.bf16.msra.mxu0 %v229
    %267 = vmatprep.subr.bf16.mxu0 0
    %268 = vmatpush1.bf16.msra.mxu0 %v230
    %269 = vmatprep.subr.bf16.mxu0 0
    %270 = vmatpush1.bf16.msra.mxu0 %v231
    %271 = vmatprep.subr.bf16.mxu0 0
    %272 = vmatpush1.bf16.msra.mxu0 %v232
    %273 = vmatprep.subr.bf16.mxu0 0
    %274 = vmatpush1.bf16.msra.mxu0 %v233
    %275 = vmatprep.subr.bf16.mxu0 0
    %276 = vmatpush1.bf16.msra.mxu0 %v234
    %277 = vmatprep.subr.bf16.mxu0 0
    %278 = vmatpush1.bf16.msra.mxu0 %v235
    %279 = vmatprep.subr.bf16.mxu0 0
    %280 = vmatpush1.bf16.msra.mxu0 %v236
    %281 = vmatprep.subr.bf16.mxu0 0
    %282 = vmatpush1.bf16.msra.mxu0 %v237
    %283 = vmatprep.subr.bf16.mxu0 0
    %284 = vmatpush1.bf16.msra.mxu0 %v238
    %285 = vmatprep.subr.bf16.mxu0 0
    %286 = vmatpush1.bf16.msra.mxu0 %v239
    %287 = vmatprep.subr.bf16.mxu0 0
    %288 = vmatpush1.bf16.msra.mxu0 %v240
    %289 = vmatprep.mubr.bf16.mxu0 %v121
    %290 = vmatmul.mubr.bf16.gmra.mrb[0].mxu0 %v120
    %v291 = vpop.f32.mrb[0].mxu0
    %v292 = vadd.f32 %v159, %v291
    %v293 = vpop.f32.mrb[0].mxu0
    %v294 = vpop.f32.mrb[0].mxu0
    %v295 = vpop.f32.mrb[0].mxu0
    %296 = vdwg.mxu0
    %v297 = vmax.f32 %v292, 0.0
    %v298 = vpack.c.bf16 %v297, %v297
    %v299 = vld [vmem:[%s5] sm:$0xf]
    %v300 = vld [vmem:[%s5 + $0x4] sm:$0xf]
    %v301 = vld [vmem:[%s5 + $0x8] sm:$0xf]
    %v302 = vld [vmem:[%s5 + $0xc] sm:$0xf]
    %v303 = vld [vmem:[%s5 + $0x10] sm:$0xf]
    %v304 = vld [vmem:[%s5 + $0x14] sm:$0xf]
    %v305 = vld [vmem:[%s5 + $0x18] sm:$0xf]
    %v306 = vld [vmem:[%s5 + $0x1c] sm:$0xf]
    %v307 = vld [vmem:[%s5 + $0x20] sm:$0xf]
    %v308 = vld [vmem:[%s5 + $0x24] sm:$0xf]
    %v309 = vld [vmem:[%s5 + $0x28] sm:$0xf]
    %v310 = vld [vmem:[%s5 + $0x2c] sm:$0xf]
    %v311 = vld [vmem:[%s5 + $0x30] sm:$0xf]
    %v312 = vld [vmem:[%s5 + $0x34] sm:$0xf]
    %v313 = vld [vmem:[%s5 + $0x38] sm:$0xf]
    %v314 = vld [vmem:[%s5 + $0x3c] sm:$0xf]
    %v315 = vld [vmem:[%s6] sm:$0x1]
    %v317 = vlaneseq
    %v318 = vshrl.u32 %v317, 7
    %v319 = vsub.s32 0, %v318
    %v320 = vrot.slane %v315, %v319
    %v338 = vunpack.c.l.b16 %v299
    %v339 = vunpack.c.l.b16 %v300
    %v340 = vunpack.c.l.b16 %v301
    %v341 = vunpack.c.l.b16 %v302
    %v342 = vunpack.c.l.b16 %v303
    %v343 = vunpack.c.l.b16 %v304
    %v344 = vunpack.c.l.b16 %v305
    %v345 = vunpack.c.l.b16 %v306
    %v346 = vunpack.c.l.b16 %v307
    %v347 = vunpack.c.l.b16 %v308
    %v348 = vunpack.c.l.b16 %v309
    %v349 = vunpack.c.l.b16 %v310
    %v350 = vunpack.c.l.b16 %v311
    %v351 = vunpack.c.l.b16 %v312
    %v352 = vunpack.c.l.b16 %v313
    %v353 = vunpack.c.l.b16 %v314
    %v354 = vpack.c.b16 %v339, %v338
    %v355 = vpack.c.b16 %v341, %v340
    %v356 = vpack.c.b16 %v343, %v342
    %v357 = vpack.c.b16 %v345, %v344
    %v358 = vpack.c.b16 %v347, %v346
    %v359 = vpack.c.b16 %v349, %v348
    %v360 = vpack.c.b16 %v351, %v350
    %v361 = vpack.c.b16 %v353, %v352
    %370 = vmatprep.subr.bf16.mxu0 0
    %371 = vmatpush1.bf16.msra.mxu0 %v354
    %372 = vmatprep.subr.bf16.mxu0 0
    %373 = vmatpush1.bf16.msra.mxu0 %v355
    %374 = vmatprep.subr.bf16.mxu0 0
    %375 = vmatpush1.bf16.msra.mxu0 %v356
    %376 = vmatprep.subr.bf16.mxu0 0
    %377 = vmatpush1.bf16.msra.mxu0 %v357
    %378 = vmatprep.subr.bf16.mxu0 0
    %379 = vmatpush1.bf16.msra.mxu0 %v358
    %380 = vmatprep.subr.bf16.mxu0 0
    %381 = vmatpush1.bf16.msra.mxu0 %v359
    %382 = vmatprep.subr.bf16.mxu0 0
    %383 = vmatpush1.bf16.msra.mxu0 %v360
    %384 = vmatprep.subr.bf16.mxu0 0
    %385 = vmatpush1.bf16.msra.mxu0 %v361
    %386 = vmatprep.subr.bf16.mxu0 0
    %387 = vmatpush1.bf16.msra.mxu0 0
    %388 = vmatprep.subr.bf16.mxu0 0
    %389 = vmatpush1.bf16.msra.mxu0 0
    %390 = vmatprep.subr.bf16.mxu0 0
    %391 = vmatpush1.bf16.msra.mxu0 0
    %392 = vmatprep.subr.bf16.mxu0 0
    %393 = vmatpush1.bf16.msra.mxu0 0
    %394 = vmatprep.subr.bf16.mxu0 0
    %395 = vmatpush1.bf16.msra.mxu0 0
    %396 = vmatprep.subr.bf16.mxu0 0
    %397 = vmatpush1.bf16.msra.mxu0 0
    %398 = vmatprep.subr.bf16.mxu0 0
    %399 = vmatpush1.bf16.msra.mxu0 0
    %400 = vmatprep.subr.bf16.mxu0 0
    %401 = vmatpush1.bf16.msra.mxu0 0
    %402 = vmatprep.mubr.bf16.mxu0 0
    %403 = vmatmul.mubr.bf16.gmra.mrb[0].mxu0 %v298
    %v404 = vpop.f32.mrb[0].mxu0
    %v405 = vadd.f32 %v320, %v404
    %v406 = vpop.f32.mrb[0].mxu0
    %v407 = vpop.f32.mrb[0].mxu0
    %v408 = vpop.f32.mrb[0].mxu0
    %409 = vdwg.mxu0
    %v410 = vmax.f32 %v405, 0.0
    %v411 = vld [vmem:[%s7] sm:$0x1]
    %v413 = vlaneseq
    %v414 = vshrl.u32 %v413, 7
    %v415 = vsub.s32 0, %v414
    %v416 = vrot.slane %v411, %v415
    %v418 = vmul.f32 %v410, %v416
    %vm419 = vcmask 523264
    %v420 = vsel %vm419, %v418, 0.0
    %421 = vadd.xlane.f32.xlu0 %v420
    %v422 = vpop.xlane.xlu0 %421
    %s423 = sld [smem:[#allocation2]]
    %v424 = vstv %s423
    %v425 = vadd.f32 %v422, %v424
    %v426 = vxor.u32 %v425, 2147483648
    %v427 = vmul.f32 %v426, 1.442695
    %v428 = vpow.pop %v427
    %v429 = vadd.f32 %v428, 1.0
    %v430 = vrcp.pop %v429
    %v431 = vmul.f32 1.0, %v430
    %432 = vxpose.xlu0.b32.start [1/16] %v431, 128
    %433 = vxpose.xlu0.b32.cont [2/16] 0.0, 128
    %434 = vxpose.xlu0.b32.cont [3/16] 0.0, 128
    %435 = vxpose.xlu0.b32.cont [4/16] 0.0, 128
    %436 = vxpose.xlu0.b32.cont [5/16] 0.0, 128
    %437 = vxpose.xlu0.b32.cont [6/16] 0.0, 128
    %438 = vxpose.xlu0.b32.cont [7/16] 0.0, 128
    %439 = vxpose.xlu0.b32.cont [8/16] 0.0, 128
    %440 = vxpose.xlu0.b32.cont [9/16] 0.0, 128
    %441 = vxpose.xlu0.b32.cont [10/16] 0.0, 128
    %442 = vxpose.xlu0.b32.cont [11/16] 0.0, 128
    %443 = vxpose.xlu0.b32.cont [12/16] 0.0, 128
    %444 = vxpose.xlu0.b32.cont [13/16] 0.0, 128
    %445 = vxpose.xlu0.b32.cont [14/16] 0.0, 128
    %446 = vxpose.xlu0.b32.cont [15/16] 0.0, 128
    %447 = vxpose.xlu0.b32.end [16/16] 0.0, 128
    %v448 = vpop.trf.xlu0
    %v449 = vpop.trf.xlu0
    %v450 = vpop.trf.xlu0
    %v451 = vpop.trf.xlu0
    %v452 = vpop.trf.xlu0
    %v453 = vpop.trf.xlu0
    %v454 = vpop.trf.xlu0
    %v455 = vpop.trf.xlu0
    %v456 = vpop.trf.xlu0
    %v457 = vpop.trf.xlu0
    %v458 = vpop.trf.xlu0
    %v459 = vpop.trf.xlu0
    %v460 = vpop.trf.xlu0
    %v461 = vpop.trf.xlu0
    %v462 = vpop.trf.xlu0
    %v463 = vpop.trf.xlu0
    %vm464 = vcmask 57344
    %465 = vst.msk [vmem:[#allocation3] sm:$0x1] %vm464, %v448
    // Predicated region
    $region38: #{mlp_forward.1} parent=1 // pred_check
      _
    $region39: #{mlp_forward.1} parent=1 // pred_check_branch
      %467 = sbr.rel (0) target = $region41
    $region40: #{mlp_forward.1} parent=1 // pred_region
      %s469 = ssub.s32 16, 16
      %470 = vsyncadd [#allocation4], %s469
      %s472 = sshll.u32 [#allocation3], 4
      %s473 = int_to_ptr.vmem [resolvable:$true] %s472
      %475 = dma.vmem_to_hbm [thread:$0]  %s473, 16, %s9, [#allocation4]
    $region41: #{mlp_forward.1} parent=1 // pred_fallthru
      _
    // Predicated region
    $region42: #{mlp_forward.1} parent=1 // pred_check
      _
    $region43: #{mlp_forward.1} parent=1 // pred_check_branch
      %477 = sbr.rel (0) target = $region45
    $region44: #{mlp_forward.1} parent=1 // pred_region
      %478 = dma.done [#allocation4], 16
    $region45: #{mlp_forward.1} parent=1 // pred_fallthru
      _
    %479 = vsyncpa [#allocation4], 1

</llo_original>
